<compile_context>
chip_gen: v7x
topology: tpu7x:2x2x1
jax: 0.10.0
libtpu: 0.0.40
codegen_flags: <defaults>
</compile_context>

<pallas_src>
import jax
import jax.numpy as jnp
from jax import lax
from jax.experimental import pallas as pl
from jax.experimental.pallas import tpu as pltpu

# ---- ContrastiveLoss hyper-parameters (module defaults) ---------------------
NEGATIVE_SAMPLES = 5
EPS = 1.0
CLAMP_HIGH = 1.0
CLAMP_LOW = 1e-4


# ---- neighbor index construction (host-side glue, mirrors make_neighbor_indices)
def make_neighbor_indices(key, batch_size, negative_samples):
    b = batch_size
    if negative_samples < 2 * b - 2:
        neg_inds = jax.random.randint(key, (b, negative_samples), 0, 2 * b - 1)
        neg_inds = neg_inds + (jnp.arange(1, b + 1) - 2 * b)[:, None]
        # torch wraps negative indices at gather time; make that explicit so every index is
        # in [0, 2b) (the kernel's one-hot lane selection requires non-negative indices).
        neg_inds = jnp.mod(neg_inds, 2 * b)
    else:
        all_inds1 = jnp.tile(jnp.arange(b)[None, :], (b, 1))
        not_self = ~jnp.eye(b, dtype=bool)
        neg_inds1 = all_inds1[not_self].reshape(b, b - 1)
        all_inds2 = jnp.tile(jnp.arange(b, 2 * b)[None, :], (b, 1))
        neg_inds2 = all_inds2[not_self].reshape(b, b - 1)
        neg_inds = jnp.concatenate([neg_inds1, neg_inds2], axis=1)
    neigh_inds = jnp.concatenate([jnp.arange(b, 2 * b)[:, None], neg_inds], axis=1)
    return neigh_inds.astype(jnp.int32)


# ---- Fused kernel: Gram matmul + one-hot select + umap loss -----------------
def _umap_loss_kernel(idx_ref, feat_ref, fsq_ref, o_ref, acc_ref):
    """
    idx_ref : VMEM (tm, k)  int32 -- neighbor indices for this row tile (col 0 = positive)
    feat_ref: VMEM (2b, d)  f32   -- full feature matrix, resident across the grid
    fsq_ref : VMEM (1, 2b)  f32   -- per-row squared norms of `features`
    o_ref   : VMEM (1, 1)   f32   -- final mean loss (written in the last grid step)
    acc_ref : VMEM (tm, 1)  f32   -- per-row loss accumulator (persists across grid steps)
    """
    i = pl.program_id(0)
    tm, k = idx_ref.shape
    n2 = feat_ref.shape[0]          # 2b
    b = n2 // 2

    @pl.when(i == 0)
    def _init():
        acc_ref[...] = jnp.zeros_like(acc_ref)

    row0 = pl.multiple_of(i * tm, tm)
    origs = feat_ref[pl.ds(row0, tm), :]                         # (tm, d) query rows
    o_norm = jnp.sum(origs * origs, axis=1, keepdims=True)       # (tm, 1), exact VPU

    # -- positive pair (slot 0): neigh_inds[:, 0] == arange(b, 2b) by construction (see
    #    make_neighbor_indices), so the positive row for global row r is row b + r.
    #    Computed exactly on the VPU — no MXU precision dependence for the -log(p) term.
    pos = feat_ref[pl.ds(pl.multiple_of(b + i * tm, tm), tm), :]  # (tm, d)
    dpos = origs - pos
    sq_pos = jnp.sum(dpos * dpos, axis=1, keepdims=True)          # (tm, 1)
    p_pos = 1.0 / (EPS + sq_pos)
    loss = -jnp.log(jnp.clip(p_pos, CLAMP_LOW, CLAMP_HIGH))       # (tm, 1)

    # -- negative samples (slots 1..k-1) via the Gram formulation on the MXU:
    #    sq_all[r, c] = ||x_r||^2 + ||f_c||^2 - 2 <x_r, f_c>; then select the needed column
    #    per row with a one-hot lane mask (exactly one lane matches, indices in [0, 2b)).
    gram = lax.dot_general(origs, feat_ref[...],
                           (((1,), (1,)), ((), ())),
                           preferred_element_type=jnp.float32)    # (tm, 2b)
    sq_all = jnp.maximum(fsq_ref[...] + o_norm - 2.0 * gram, 0.0)  # (tm, 2b)
    idx = idx_ref[...]                                             # (tm, k) int32
    lane = lax.broadcasted_iota(jnp.int32, (tm, n2), 1)
    for j in range(1, k):                                          # k is small and static
        onehot = lane == idx[:, j:j + 1]
        sq_j = jnp.sum(jnp.where(onehot, sq_all, 0.0), axis=1, keepdims=True)  # (tm, 1)
        p_j = 1.0 / (EPS + sq_j)
        loss = loss - jnp.log(jnp.clip(1.0 - p_j, CLAMP_LOW, CLAMP_HIGH))

    acc_ref[...] = acc_ref[...] + loss

    @pl.when(i == pl.num_programs(0) - 1)
    def _finalize():
        # mean over the (b, k) loss matrix ('mean' aggregation)
        o_ref[...] = jnp.sum(acc_ref[...], keepdims=True) * (1.0 / float(b * k))


def _pick_row_tile(b, n2):
    # Fat tiles cut per-grid-step overhead; cap so the (tile, 2b) Gram block stays ~4 MiB.
    cap = min(b, 1024, max(8, (4 * 1024 * 1024) // (4 * n2)))
    cap -= cap % 8
    for cand in range(cap, 7, -8):
        if b % cand == 0:
            return cand
    return 8


# ---- Forward pass (matches ContrastiveLoss.forward, euclidean/'umap'/mean) --
@jax.jit
def contrastive_loss_forward(features, neigh_inds):
    features = features.astype(jnp.float32)
    n, d = features.shape
    b = n // 2
    k = neigh_inds.shape[1]
    assert b % 8 == 0, "batch half-size must be a multiple of 8 (TPU sublane tiling)"

    row_tile = _pick_row_tile(b, n)
    grid = (b // row_tile,)

    feat_sq = jnp.sum(features * features, axis=1)[None, :]       # (1, 2b) squared norms

    feat_bytes = n * d * 4
    vmem_needed = (2 * feat_bytes + 2 * row_tile * n * 4
                   + 2 * row_tile * (k + 4) * 4 + (1 << 20))
    vmem_limit = int(min(max(2 * vmem_needed, 16 << 20), 48 << 20))  # <= 48 MiB for v7x

    grid_spec = pltpu.PrefetchScalarGridSpec(
        num_scalar_prefetch=0,
        grid=grid,
        in_specs=[
            # neighbor-index tile for this block of rows (VMEM, no SMEM padding blow-up)
            pl.BlockSpec((row_tile, k), lambda i: (i, 0)),
            # full feature matrix, resident across the whole grid (constant block index)
            pl.BlockSpec((n, d), lambda i: (0, 0)),
            # per-row squared norms, resident
            pl.BlockSpec((1, n), lambda i: (0, 0)),
        ],
        out_specs=pl.BlockSpec((1, 1), lambda i: (0, 0)),
        scratch_shapes=[pltpu.VMEM((row_tile, 1), jnp.float32)],
    )

    out = pl.pallas_call(
        _umap_loss_kernel,
        out_shape=jax.ShapeDtypeStruct((1, 1), jnp.float32),
        grid_spec=grid_spec,
        compiler_params=pltpu.CompilerParams(
            # Row-tile axis is a reduction into the resident accumulator / (1,1) output.
            # TODO(synk): on v7x, per-tile partial sums + "parallel" would use both TCs.
            dimension_semantics=("arbitrary",),
            vmem_limit_bytes=vmem_limit,
        ),
        cost_estimate=pl.CostEstimate(
            flops=2 * b * n * d + 4 * b * d + 16 * b * k,
            transcendentals=b * k,
            bytes_accessed=feat_bytes + n * 4 + b * k * 4 + 4,
        ),
    )(neigh_inds.astype(jnp.int32), features, feat_sq)

    # TODO(synk): 'nce'/'neg'/'infonce' loss modes and the cosine metric are not wired up.
    return out[0, 0]


# ---- Pure-JAX reference for sanity checking ---------------------------------
def reference_loss(features, neigh_inds):
    b = features.shape[0] // 2
    origs = features[:b]
    neighbors = features[neigh_inds]                               # (b, k, d)
    sq = jnp.sum((origs[:, None, :] - neighbors) ** 2, axis=2)     # (b, k)
    probits = 1.0 / (EPS + sq)
    pos = jnp.zeros(sq.shape, jnp.float32).at[:, 0].set(1.0)
    neg = 1.0 - pos
    loss = (-pos * jnp.log(jnp.clip(probits, CLAMP_LOW, CLAMP_HIGH))
            - neg * jnp.log(jnp.clip(1.0 - probits, CLAMP_LOW, CLAMP_HIGH)))
    return jnp.mean(loss)


if __name__ == "__main__":
    b, d = 8, 32                                   # features: [2*b, d] = [16, 32]
    key = jax.random.PRNGKey(0)
    k_feat, k_neigh = jax.random.split(key)

    features = jax.random.normal(k_feat, (2 * b, d), dtype=jnp.float32)
    negative_samples = min(NEGATIVE_SAMPLES, 2 * b - 2)
    neigh_inds = make_neighbor_indices(k_neigh, b, negative_samples)  # (b, ns+1)

    loss = contrastive_loss_forward(features, neigh_inds)
    loss = jax.block_until_ready(loss)

    ref = reference_loss(features, neigh_inds)
    assert jnp.allclose(loss, ref, rtol=1e-4, atol=1e-5), (loss, ref)

    print("KERNEL_OK")
</pallas_src>

<mosaic_0001>
module attributes {stable_mosaic.version = 11 : i64} {
  func.func @_umap_loss_kernel(%arg0: i32, %arg1: memref<8x6xi32, #tpu.memory_space<vmem>>, %arg2: memref<16x32xf32, #tpu.memory_space<vmem>>, %arg3: memref<1x16xf32, #tpu.memory_space<vmem>>, %arg4: memref<1x1xf32, #tpu.memory_space<vmem>>, %arg5: memref<8x1xf32, #tpu.memory_space<vmem>>) attributes {dimension_semantics = [#tpu.dimension_semantics<arbitrary>], iteration_bounds = array<i64: 1>, scalar_prefetch = 0 : i64, scratch_operands = 1 : i64, tpu.core_type = #tpu.core_type<tc>, window_params = [{transform_indices = @transform_0, window_bounds = array<i64: 8, 6>}, {pipeline_mode = #tpu.pipeline_mode<synchronous>, transform_indices = @transform_1, window_bounds = array<i64: 16, 32>}, {pipeline_mode = #tpu.pipeline_mode<synchronous>, transform_indices = @transform_2, window_bounds = array<i64: 1, 16>}, {pipeline_mode = #tpu.pipeline_mode<synchronous>, transform_indices = @transform_3, window_bounds = array<i64: 1, 1>}]} {
    %c0_i32 = arith.constant 0 : i32
    %0 = arith.cmpi eq, %arg0, %c0_i32 : i32
    %1 = arith.extui %0 : i1 to i32
    %c0_i32_0 = arith.constant 0 : i32
    %2 = arith.cmpi ne, %1, %c0_i32_0 : i32
    scf.if %2 {
      %cst_60 = arith.constant 0.000000e+00 : f32
      %144 = vector.broadcast %cst_60 : f32 to vector<8x1xf32>
      %c0_61 = arith.constant 0 : index
      %c0_62 = arith.constant 0 : index
      %145 = vector.load %arg5[%c0_61, %c0_62] : memref<8x1xf32, #tpu.memory_space<vmem>>, vector<8x1xf32>
      tpu.vector_store %arg5[%c0_61, %c0_62], %144 {strides = array<i32>} : memref<8x1xf32, #tpu.memory_space<vmem>>, vector<8x1xf32>,
    } else {
    }
    %c8_i32 = arith.constant 8 : i32
    %3 = arith.muli %arg0, %c8_i32 : i32
    %4 = tpu.assume_multiple %3, 8 : i32
    %5 = arith.index_cast %4 : i32 to index
    %c0 = arith.constant 0 : index
    %6 = vector.load %arg2[%5, %c0] : memref<16x32xf32, #tpu.memory_space<vmem>>, vector<8x32xf32>
    %7 = arith.mulf %6, %6 : vector<8x32xf32>
    %cst = arith.constant dense<0.000000e+00> : vector<8xf32>
    %8 = vector.multi_reduction <add>, %7, %cst [1] : vector<8x32xf32> to vector<8xf32>
    %9 = vector.shape_cast %8 : vector<8xf32> to vector<8x1xf32>
    %c8_i32_1 = arith.constant 8 : i32
    %10 = arith.muli %arg0, %c8_i32_1 : i32
    %c8_i32_2 = arith.constant 8 : i32
    %11 = arith.addi %c8_i32_2, %10 : i32
    %12 = tpu.assume_multiple %11, 8 : i32
    %13 = arith.index_cast %12 : i32 to index
    %c0_3 = arith.constant 0 : index
    %14 = vector.load %arg2[%13, %c0_3] : memref<16x32xf32, #tpu.memory_space<vmem>>, vector<8x32xf32>
    %15 = arith.subf %6, %14 : vector<8x32xf32>
    %16 = arith.mulf %15, %15 : vector<8x32xf32>
    %cst_4 = arith.constant dense<0.000000e+00> : vector<8xf32>
    %17 = vector.multi_reduction <add>, %16, %cst_4 [1] : vector<8x32xf32> to vector<8xf32>
    %18 = vector.shape_cast %17 : vector<8xf32> to vector<8x1xf32>
    %cst_5 = arith.constant 1.000000e+00 : f32
    %19 = vector.broadcast %cst_5 : f32 to vector<8x1xf32>
    %20 = arith.addf %19, %18 : vector<8x1xf32>
    %cst_6 = arith.constant 1.000000e+00 : f32
    %21 = vector.broadcast %cst_6 : f32 to vector<8x1xf32>
    %22 = arith.divf %21, %20 : vector<8x1xf32>
    %cst_7 = arith.constant 9.99999974E-5 : f32
    %cst_8 = arith.constant 1.000000e+00 : f32
    %23 = vector.broadcast %cst_7 : f32 to vector<8x1xf32>
    %24 = arith.maximumf %23, %22 : vector<8x1xf32>
    %25 = vector.broadcast %cst_8 : f32 to vector<8x1xf32>
    %26 = arith.minimumf %25, %24 : vector<8x1xf32>
    %27 = math.log %26 : vector<8x1xf32>
    %cst_9 = arith.constant 0.000000e+00 : f32
    %28 = vector.broadcast %cst_9 : f32 to vector<8x1xf32>
    %29 = arith.subf %28, %27 : vector<8x1xf32>
    %c0_10 = arith.constant 0 : index
    %c0_11 = arith.constant 0 : index
    %30 = vector.load %arg2[%c0_10, %c0_11] : memref<16x32xf32, #tpu.memory_space<vmem>>, vector<16x32xf32>
    %cst_12 = arith.constant dense<0.000000e+00> : vector<8x16xf32>
    %31 = tpu.matmul %6, %30, %cst_12 {dimension_numbers = #tpu.dot_dimension_numbers<[1], [1], [0], [0], [0, 0, 1, 0], [], []>} : vector<8x32xf32>, vector<16x32xf32>, vector<8x16xf32> -> vector<8x16xf32>
    %c0_13 = arith.constant 0 : index
    %c0_14 = arith.constant 0 : index
    %32 = vector.load %arg3[%c0_13, %c0_14] : memref<1x16xf32, #tpu.memory_space<vmem>>, vector<1x16xf32>
    %33 = vector.broadcast %32 : vector<1x16xf32> to vector<8x16xf32>
    %34 = vector.broadcast %9 : vector<8x1xf32> to vector<8x16xf32>
    %35 = arith.addf %33, %34 : vector<8x16xf32>
    %cst_15 = arith.constant 2.000000e+00 : f32
    %36 = vector.broadcast %cst_15 : f32 to vector<8x16xf32>
    %37 = arith.mulf %36, %31 : vector<8x16xf32>
    %38 = arith.subf %35, %37 : vector<8x16xf32>
    %cst_16 = arith.constant 0.000000e+00 : f32
    %39 = vector.broadcast %cst_16 : f32 to vector<8x16xf32>
    %40 = arith.maximumf %38, %39 : vector<8x16xf32>
    %c0_17 = arith.constant 0 : index
    %c0_18 = arith.constant 0 : index
    %41 = vector.load %arg1[%c0_17, %c0_18] : memref<8x6xi32, #tpu.memory_space<vmem>>, vector<8x6xi32>
    %42 = tpu.iota {dimensions = array<i32: 1>} : vector<8x16xi32>
    %43 = vector.extract_strided_slice %41 {offsets = [0, 1], sizes = [8, 1], strides = [1, 1]} : vector<8x6xi32> to vector<8x1xi32>
    %44 = vector.broadcast %43 : vector<8x1xi32> to vector<8x16xi32>
    %45 = arith.cmpi eq, %42, %44 : vector<8x16xi32>
    %cst_19 = arith.constant 0.000000e+00 : f32
    %46 = vector.broadcast %cst_19 : f32 to vector<8x16xf32>
    %47 = arith.select %45, %40, %46 : vector<8x16xi1>, vector<8x16xf32>
    %cst_20 = arith.constant dense<0.000000e+00> : vector<8xf32>
    %48 = vector.multi_reduction <add>, %47, %cst_20 [1] : vector<8x16xf32> to vector<8xf32>
    %49 = vector.shape_cast %48 : vector<8xf32> to vector<8x1xf32>
    %cst_21 = arith.constant 1.000000e+00 : f32
    %50 = vector.broadcast %cst_21 : f32 to vector<8x1xf32>
    %51 = arith.addf %50, %49 : vector<8x1xf32>
    %cst_22 = arith.constant 1.000000e+00 : f32
    %52 = vector.broadcast %cst_22 : f32 to vector<8x1xf32>
    %53 = arith.divf %52, %51 : vector<8x1xf32>
    %cst_23 = arith.constant 1.000000e+00 : f32
    %54 = vector.broadcast %cst_23 : f32 to vector<8x1xf32>
    %55 = arith.subf %54, %53 : vector<8x1xf32>
    %cst_24 = arith.constant 9.99999974E-5 : f32
    %cst_25 = arith.constant 1.000000e+00 : f32
    %56 = vector.broadcast %cst_24 : f32 to vector<8x1xf32>
    %57 = arith.maximumf %56, %55 : vector<8x1xf32>
    %58 = vector.broadcast %cst_25 : f32 to vector<8x1xf32>
    %59 = arith.minimumf %58, %57 : vector<8x1xf32>
    %60 = math.log %59 : vector<8x1xf32>
    %61 = arith.subf %29, %60 : vector<8x1xf32>
    %62 = vector.extract_strided_slice %41 {offsets = [0, 2], sizes = [8, 1], strides = [1, 1]} : vector<8x6xi32> to vector<8x1xi32>
    %63 = vector.broadcast %62 : vector<8x1xi32> to vector<8x16xi32>
    %64 = arith.cmpi eq, %42, %63 : vector<8x16xi32>
    %cst_26 = arith.constant 0.000000e+00 : f32
    %65 = vector.broadcast %cst_26 : f32 to vector<8x16xf32>
    %66 = arith.select %64, %40, %65 : vector<8x16xi1>, vector<8x16xf32>
    %cst_27 = arith.constant dense<0.000000e+00> : vector<8xf32>
    %67 = vector.multi_reduction <add>, %66, %cst_27 [1] : vector<8x16xf32> to vector<8xf32>
    %68 = vector.shape_cast %67 : vector<8xf32> to vector<8x1xf32>
    %cst_28 = arith.constant 1.000000e+00 : f32
    %69 = vector.broadcast %cst_28 : f32 to vector<8x1xf32>
    %70 = arith.addf %69, %68 : vector<8x1xf32>
    %cst_29 = arith.constant 1.000000e+00 : f32
    %71 = vector.broadcast %cst_29 : f32 to vector<8x1xf32>
    %72 = arith.divf %71, %70 : vector<8x1xf32>
    %cst_30 = arith.constant 1.000000e+00 : f32
    %73 = vector.broadcast %cst_30 : f32 to vector<8x1xf32>
    %74 = arith.subf %73, %72 : vector<8x1xf32>
    %cst_31 = arith.constant 9.99999974E-5 : f32
    %cst_32 = arith.constant 1.000000e+00 : f32
    %75 = vector.broadcast %cst_31 : f32 to vector<8x1xf32>
    %76 = arith.maximumf %75, %74 : vector<8x1xf32>
    %77 = vector.broadcast %cst_32 : f32 to vector<8x1xf32>
    %78 = arith.minimumf %77, %76 : vector<8x1xf32>
    %79 = math.log %78 : vector<8x1xf32>
    %80 = arith.subf %61, %79 : vector<8x1xf32>
    %81 = vector.extract_strided_slice %41 {offsets = [0, 3], sizes = [8, 1], strides = [1, 1]} : vector<8x6xi32> to vector<8x1xi32>
    %82 = vector.broadcast %81 : vector<8x1xi32> to vector<8x16xi32>
    %83 = arith.cmpi eq, %42, %82 : vector<8x16xi32>
    %cst_33 = arith.constant 0.000000e+00 : f32
    %84 = vector.broadcast %cst_33 : f32 to vector<8x16xf32>
    %85 = arith.select %83, %40, %84 : vector<8x16xi1>, vector<8x16xf32>
    %cst_34 = arith.constant dense<0.000000e+00> : vector<8xf32>
    %86 = vector.multi_reduction <add>, %85, %cst_34 [1] : vector<8x16xf32> to vector<8xf32>
    %87 = vector.shape_cast %86 : vector<8xf32> to vector<8x1xf32>
    %cst_35 = arith.constant 1.000000e+00 : f32
    %88 = vector.broadcast %cst_35 : f32 to vector<8x1xf32>
    %89 = arith.addf %88, %87 : vector<8x1xf32>
    %cst_36 = arith.constant 1.000000e+00 : f32
    %90 = vector.broadcast %cst_36 : f32 to vector<8x1xf32>
    %91 = arith.divf %90, %89 : vector<8x1xf32>
    %cst_37 = arith.constant 1.000000e+00 : f32
    %92 = vector.broadcast %cst_37 : f32 to vector<8x1xf32>
    %93 = arith.subf %92, %91 : vector<8x1xf32>
    %cst_38 = arith.constant 9.99999974E-5 : f32
    %cst_39 = arith.constant 1.000000e+00 : f32
    %94 = vector.broadcast %cst_38 : f32 to vector<8x1xf32>
    %95 = arith.maximumf %94, %93 : vector<8x1xf32>
    %96 = vector.broadcast %cst_39 : f32 to vector<8x1xf32>
    %97 = arith.minimumf %96, %95 : vector<8x1xf32>
    %98 = math.log %97 : vector<8x1xf32>
    %99 = arith.subf %80, %98 : vector<8x1xf32>
    %100 = vector.extract_strided_slice %41 {offsets = [0, 4], sizes = [8, 1], strides = [1, 1]} : vector<8x6xi32> to vector<8x1xi32>
    %101 = vector.broadcast %100 : vector<8x1xi32> to vector<8x16xi32>
    %102 = arith.cmpi eq, %42, %101 : vector<8x16xi32>
    %cst_40 = arith.constant 0.000000e+00 : f32
    %103 = vector.broadcast %cst_40 : f32 to vector<8x16xf32>
    %104 = arith.select %102, %40, %103 : vector<8x16xi1>, vector<8x16xf32>
    %cst_41 = arith.constant dense<0.000000e+00> : vector<8xf32>
    %105 = vector.multi_reduction <add>, %104, %cst_41 [1] : vector<8x16xf32> to vector<8xf32>
    %106 = vector.shape_cast %105 : vector<8xf32> to vector<8x1xf32>
    %cst_42 = arith.constant 1.000000e+00 : f32
    %107 = vector.broadcast %cst_42 : f32 to vector<8x1xf32>
    %108 = arith.addf %107, %106 : vector<8x1xf32>
    %cst_43 = arith.constant 1.000000e+00 : f32
    %109 = vector.broadcast %cst_43 : f32 to vector<8x1xf32>
    %110 = arith.divf %109, %108 : vector<8x1xf32>
    %cst_44 = arith.constant 1.000000e+00 : f32
    %111 = vector.broadcast %cst_44 : f32 to vector<8x1xf32>
    %112 = arith.subf %111, %110 : vector<8x1xf32>
    %cst_45 = arith.constant 9.99999974E-5 : f32
    %cst_46 = arith.constant 1.000000e+00 : f32
    %113 = vector.broadcast %cst_45 : f32 to vector<8x1xf32>
    %114 = arith.maximumf %113, %112 : vector<8x1xf32>
    %115 = vector.broadcast %cst_46 : f32 to vector<8x1xf32>
    %116 = arith.minimumf %115, %114 : vector<8x1xf32>
    %117 = math.log %116 : vector<8x1xf32>
    %118 = arith.subf %99, %117 : vector<8x1xf32>
    %119 = vector.extract_strided_slice %41 {offsets = [0, 5], sizes = [8, 1], strides = [1, 1]} : vector<8x6xi32> to vector<8x1xi32>
    %120 = vector.broadcast %119 : vector<8x1xi32> to vector<8x16xi32>
    %121 = arith.cmpi eq, %42, %120 : vector<8x16xi32>
    %cst_47 = arith.constant 0.000000e+00 : f32
    %122 = vector.broadcast %cst_47 : f32 to vector<8x16xf32>
    %123 = arith.select %121, %40, %122 : vector<8x16xi1>, vector<8x16xf32>
    %cst_48 = arith.constant dense<0.000000e+00> : vector<8xf32>
    %124 = vector.multi_reduction <add>, %123, %cst_48 [1] : vector<8x16xf32> to vector<8xf32>
    %125 = vector.shape_cast %124 : vector<8xf32> to vector<8x1xf32>
    %cst_49 = arith.constant 1.000000e+00 : f32
    %126 = vector.broadcast %cst_49 : f32 to vector<8x1xf32>
    %127 = arith.addf %126, %125 : vector<8x1xf32>
    %cst_50 = arith.constant 1.000000e+00 : f32
    %128 = vector.broadcast %cst_50 : f32 to vector<8x1xf32>
    %129 = arith.divf %128, %127 : vector<8x1xf32>
    %cst_51 = arith.constant 1.000000e+00 : f32
    %130 = vector.broadcast %cst_51 : f32 to vector<8x1xf32>
    %131 = arith.subf %130, %129 : vector<8x1xf32>
    %cst_52 = arith.constant 9.99999974E-5 : f32
    %cst_53 = arith.constant 1.000000e+00 : f32
    %132 = vector.broadcast %cst_52 : f32 to vector<8x1xf32>
    %133 = arith.maximumf %132, %131 : vector<8x1xf32>
    %134 = vector.broadcast %cst_53 : f32 to vector<8x1xf32>
    %135 = arith.minimumf %134, %133 : vector<8x1xf32>
    %136 = math.log %135 : vector<8x1xf32>
    %137 = arith.subf %118, %136 : vector<8x1xf32>
    %c0_54 = arith.constant 0 : index
    %c0_55 = arith.constant 0 : index
    %138 = vector.load %arg5[%c0_54, %c0_55] : memref<8x1xf32, #tpu.memory_space<vmem>>, vector<8x1xf32>
    %139 = arith.addf %138, %137 : vector<8x1xf32>
    %c0_56 = arith.constant 0 : index
    %c0_57 = arith.constant 0 : index
    %140 = vector.load %arg5[%c0_56, %c0_57] : memref<8x1xf32, #tpu.memory_space<vmem>>, vector<8x1xf32>
    tpu.vector_store %arg5[%c0_56, %c0_57], %139 {strides = array<i32>} : memref<8x1xf32, #tpu.memory_space<vmem>>, vector<8x1xf32>,
    %c0_i32_58 = arith.constant 0 : i32
    %141 = arith.cmpi eq, %arg0, %c0_i32_58 : i32
    %142 = arith.extui %141 : i1 to i32
    %c0_i32_59 = arith.constant 0 : i32
    %143 = arith.cmpi ne, %142, %c0_i32_59 : i32
    scf.if %143 {
      %c0_60 = arith.constant 0 : index
      %c0_61 = arith.constant 0 : index
      %144 = vector.load %arg5[%c0_60, %c0_61] : memref<8x1xf32, #tpu.memory_space<vmem>>, vector<8x1xf32>
      %145 = vector.shape_cast %144 : vector<8x1xf32> to vector<1x8x1xf32>
      %cst_62 = arith.constant dense<0.000000e+00> : vector<1xf32>
      %146 = vector.multi_reduction <add>, %145, %cst_62 [1, 2] : vector<1x8x1xf32> to vector<1xf32>
      %147 = vector.shape_cast %146 : vector<1xf32> to vector<1x1x1xf32>
      %148 = vector.extract %147[0, 0, 0] : f32 from vector<1x1x1xf32>
      %149 = vector.broadcast %148 : f32 to vector<1x1xf32>
      %cst_63 = arith.constant 0.020833334 : f32
      %150 = vector.broadcast %cst_63 : f32 to vector<1x1xf32>
      %151 = arith.mulf %149, %150 : vector<1x1xf32>
      %c0_64 = arith.constant 0 : index
      %c0_65 = arith.constant 0 : index
      %152 = vector.load %arg4[%c0_64, %c0_65] : memref<1x1xf32, #tpu.memory_space<vmem>>, vector<1x1xf32>
      tpu.vector_store %arg4[%c0_64, %c0_65], %151 {strides = array<i32>} : memref<1x1xf32, #tpu.memory_space<vmem>>, vector<1x1xf32>,
    } else {
    }
    return
  }
  func.func @transform_0(%arg0: i32) -> (i32, i32) {
    %c0_i32 = arith.constant 0 : i32
    %c0_i32_0 = arith.constant 0 : i32
    return %arg0, %c0_i32 : i32, i32
  }
  func.func @transform_1(%arg0: i32) -> (i32, i32) {
    %c0_i32 = arith.constant 0 : i32
    %c0_i32_0 = arith.constant 0 : i32
    %c0_i32_1 = arith.constant 0 : i32
    return %c0_i32, %c0_i32_0 : i32, i32
  }
  func.func @transform_2(%arg0: i32) -> (i32, i32) {
    %c0_i32 = arith.constant 0 : i32
    %c0_i32_0 = arith.constant 0 : i32
    %c0_i32_1 = arith.constant 0 : i32
    return %c0_i32, %c0_i32_0 : i32, i32
  }
  func.func @transform_3(%arg0: i32) -> (i32, i32) {
    %c0_i32 = arith.constant 0 : i32
    %c0_i32_0 = arith.constant 0 : i32
    %c0_i32_1 = arith.constant 0 : i32
    return %c0_i32, %c0_i32_0 : i32, i32
  }
}

</mosaic_0001>

<llo_original>
// kernel: contrastive_loss_forward.1
$region0: #{contrastive_loss_forward.1}
  #allocation0 [shape = 'u32[]', space=smem, size = 0x4, offset = 0x4, fixed_abs, tag = 'smem constant byte address 0x4 - core index']
  #allocation1 [shape = 'u32[144,128]{1,0:T(1,128)}', space=vmem, size = 0x12000, scoped, tag = 'internal scratch']
  #allocation2 [shape = 'f32[8,1]{1,0:T(8,128)}', space=vmem, size = 0x1000, scoped, tag = 'scratch operand']
  %s0 = inlined_call_operand.vmem [shape: s32[8,6], index: 0, kind: input, shape index: {}]
  %s1 = inlined_call_operand.vmem [shape: f32[16,32], index: 1, kind: input, shape index: {}]
  %s2 = inlined_call_operand.vmem [shape: f32[1,16], index: 2, kind: input, shape index: {}]
  %s3 = inlined_call_operand.hbm [shape: f32[1,1], index: 3, kind: output, shape index: {}]
  %s4 = sld [smem:[#allocation0]]
  $region30: #{contrastive_loss_forward.1} parent=0
    _
  %s6 = ssub.s32 1, %s4
  %s7 = scalar_select 0, %s6, %s4
  $region1: #{contrastive_loss_forward.1} parent=0
    #allocation3 [shape = 'u8[512]{0}', space=vmem, size = 0x400, scoped, tag = 'output window, operand 0, single buffered']
    #allocation4 [shape = 's32[1]{0}', space=sflag, size = 0x4, scoped, tag = 'scoped memory for contrastive_loss_forward.1']
    %8 = vsyncpa [#allocation4], 0
    // Predicated region
    $region2: #{contrastive_loss_forward.1} parent=1 // pred_check
      _
    $region3: #{contrastive_loss_forward.1} parent=1 // pred_check_branch
      %10 = sbr.rel (0) target = $region5
    $region4: #{contrastive_loss_forward.1} parent=1 // pred_region
      _
    $region5: #{contrastive_loss_forward.1} parent=1 // pred_fallthru
      _
    // Predicated region
    $region6: #{contrastive_loss_forward.1} parent=1 // pred_check
      _
    $region7: #{contrastive_loss_forward.1} parent=1 // pred_check_branch
      %12 = sbr.rel (0) target = $region9
    $region8: #{contrastive_loss_forward.1} parent=1 // pred_region
      _
    $region9: #{contrastive_loss_forward.1} parent=1 // pred_fallthru
      _
    // Predicated region
    $region10: #{contrastive_loss_forward.1} parent=1 // pred_check
      _
    $region11: #{contrastive_loss_forward.1} parent=1 // pred_check_branch
      %14 = sbr.rel (0) target = $region13
    $region12: #{contrastive_loss_forward.1} parent=1 // pred_region
      _
    $region13: #{contrastive_loss_forward.1} parent=1 // pred_fallthru
      _
    %p15 = scmp.eq.s32.totalorder 0, 0
    // Predicated region
    $region14: #{contrastive_loss_forward.1} parent=1 // pred_check
      %p16 = pneg %p15
    $region15: #{contrastive_loss_forward.1} parent=1 // pred_check_branch
      %18 = sbr.rel (%p16) target = $region17
    $region16: #{contrastive_loss_forward.1} parent=1 // pred_region
      %vm19 = vcmask 7168
      %20 = vst.msk [vmem:[#allocation2] sm:$0xff] %vm19, 0.0
    $region17: #{contrastive_loss_forward.1} parent=1 // pred_fallthru
      _
    %s21 = smul.u32 0, 8
    %s22 = scalar_lea.vmem %s1, %s21
    %v23 = vld [vmem:[%s22] sm:$0xff]
    %v24 = vmul.f32 %v23, %v23
    %vm25 = vcmask 261120
    %v26 = vsel %vm25, %v24, 0.0
    %27 = vadd.xlane.f32.xlu0 %v26
    %v28 = vpop.xlane.xlu0 %27
    %s29 = sadd.s32 %s21, 8
    %s30 = scalar_lea.vmem %s1, %s29
    %v31 = vld [vmem:[%s30] sm:$0xff]
    %v32 = vsub.f32 %v23, %v31
    %v33 = vmul.f32 %v32, %v32
    %v34 = vsel %vm25, %v33, 0.0
    %35 = vadd.xlane.f32.xlu0 %v34
    %v36 = vpop.xlane.xlu0 %35
    %v37 = vadd.f32 %v36, 1.0
    %v38 = vrcp.pop %v37
    %v39 = vmul.f32 1.0, %v38
    %v40 = vmax.f32 %v39, 0.0001
    %v41 = vmin.f32 %v40, 1.0
    %v42 = vlog2.pop %v41
    %v43 = vmul.f32 %v42, 0.6931472
    %v44 = vsub.f32 0.0, %v43
    %v45 = vld [vmem:[%s1] sm:$0xff]
    %v46 = vld [vmem:[%s1 + $0x8] sm:$0xff]
    %v48 = vsel %vm25, %v23, 0
    %v51 = vsel %vm25, %v45, 0
    %v54 = vsel %vm25, %v46, 0
    %56 = vmatprep.subr.mxu0 0.0
    %57 = vmatpush1.xpose.msra.mxu0 %v51
    %58 = vmatprep.subr.mxu0 0.0
    %59 = vmatpush1.xpose.msra.mxu0 %v54
    %60 = vmatprep.subr.mxu0 0.0
    %61 = vmatpush1.xpose.msra.mxu0 0.0
    %62 = vmatprep.subr.mxu0 0.0
    %63 = vmatpush1.xpose.msra.mxu0 0.0
    %64 = vmatprep.subr.mxu0 0.0
    %65 = vmatpush1.xpose.msra.mxu0 0.0
    %66 = vmatprep.subr.mxu0 0.0
    %67 = vmatpush1.xpose.msra.mxu0 0.0
    %68 = vmatprep.subr.mxu0 0.0
    %69 = vmatpush1.xpose.msra.mxu0 0.0
    %70 = vmatprep.subr.mxu0 0.0
    %71 = vmatpush1.xpose.msra.mxu0 0.0
    %72 = vmatprep.subr.mxu0 0.0
    %73 = vmatpush1.xpose.msra.mxu0 0.0
    %74 = vmatprep.subr.mxu0 0.0
    %75 = vmatpush1.xpose.msra.mxu0 0.0
    %76 = vmatprep.subr.mxu0 0.0
    %77 = vmatpush1.xpose.msra.mxu0 0.0
    %78 = vmatprep.subr.mxu0 0.0
    %79 = vmatpush1.xpose.msra.mxu0 0.0
    %80 = vmatprep.subr.mxu0 0.0
    %81 = vmatpush1.xpose.msra.mxu0 0.0
    %82 = vmatprep.subr.mxu0 0.0
    %83 = vmatpush1.xpose.msra.mxu0 0.0
    %84 = vmatprep.subr.mxu0 0.0
    %85 = vmatpush1.xpose.msra.mxu0 0.0
    %86 = vmatprep.subr.mxu0 0.0
    %87 = vmatpush1.xpose.msra.mxu0 0.0
    %88 = vmatprep.subr.mxu0 0.0
    %89 = vmatpush1.xpose.msra.mxu0 0.0
    %90 = vmatprep.subr.mxu0 0.0
    %91 = vmatpush1.xpose.msra.mxu0 0.0
    %92 = vmatprep.subr.mxu0 0.0
    %93 = vmatpush1.xpose.msra.mxu0 0.0
    %94 = vmatprep.subr.mxu0 0.0
    %95 = vmatpush1.xpose.msra.mxu0 0.0
    %96 = vmatprep.subr.mxu0 0.0
    %97 = vmatpush1.xpose.msra.mxu0 0.0
    %98 = vmatprep.subr.mxu0 0.0
    %99 = vmatpush1.xpose.msra.mxu0 0.0
    %100 = vmatprep.subr.mxu0 0.0
    %101 = vmatpush1.xpose.msra.mxu0 0.0
    %102 = vmatprep.subr.mxu0 0.0
    %103 = vmatpush1.xpose.msra.mxu0 0.0
    %104 = vmatprep.subr.mxu0 0.0
    %105 = vmatpush1.xpose.msra.mxu0 0.0
    %106 = vmatprep.subr.mxu0 0.0
    %107 = vmatpush1.xpose.msra.mxu0 0.0
    %108 = vmatprep.subr.mxu0 0.0
    %109 = vmatpush1.xpose.msra.mxu0 0.0
    %110 = vmatprep.subr.mxu0 0.0
    %111 = vmatpush1.xpose.msra.mxu0 0.0
    %112 = vmatprep.subr.mxu0 0.0
    %113 = vmatpush1.xpose.msra.mxu0 0.0
    %114 = vmatprep.subr.mxu0 0.0
    %115 = vmatpush1.xpose.msra.mxu0 0.0
    %116 = vmatprep.subr.mxu0 0.0
    %117 = vmatpush1.xpose.msra.mxu0 0.0
    %118 = vmatprep.subr.mxu0 0.0
    %119 = vmatpush1.xpose.msra.mxu0 0.0
    %120 = vmatprep.mubr.f32.mxu0 0.0
    %121 = vmatmul.mubr.f32.gmra.mrb[0].mxu0 %v48
    %v122 = vpop.f32.mrb[0].mxu0
    %v123 = vadd.f32 0.0, %v122
    %v124 = vpop.f32.mrb[0].mxu0
    %125 = vdwg.mxu0
    %v126 = vld [vmem:[%s2] sm:$0x1]
    %v128 = vlaneseq
    %v129 = vshrl.u32 %v128, 7
    %v130 = vsub.s32 0, %v129
    %v131 = vrot.slane %v126, %v130
    %v133 = vadd.f32 %v131, %v28
    %v134 = vmul.f32 %v123, 2.0
    %v135 = vsub.f32 %v133, %v134
    %v136 = vmax.f32 %v135, 0.0
    %v137 = vld [vmem:[%s0] sm:$0xff]
    %v138 = vlaneseq
    %v139 = vand.u32 %v138, 127
    %140 = vset.pattern.permute.xlu0 1
    %141 = vperm.xlu0 %140, %v137
    %v142 = vpop.permute.xlu0 %141
    %vm143 = vcmp.eq.s32.totalorder %v139, %v142
    %v144 = vsel %vm143, %v136, 0.0
    %vm145 = vcmask 130048
    %v146 = vsel %vm145, %v144, 0.0
    %147 = vadd.xlane.f32.xlu0 %v146
    %v148 = vpop.xlane.xlu0 %147
    %v149 = vadd.f32 %v148, 1.0
    %v150 = vrcp.pop %v149
    %v151 = vmul.f32 1.0, %v150
    %v152 = vsub.f32 1.0, %v151
    %v153 = vmax.f32 %v152, 0.0001
    %v154 = vmin.f32 %v153, 1.0
    %v155 = vlog2.pop %v154
    %v156 = vmul.f32 %v155, 0.6931472
    %v157 = vsub.f32 %v44, %v156
    %158 = vset.pattern.permute.xlu0 2
    %159 = vperm.xlu0 %158, %v137
    %v160 = vpop.permute.xlu0 %159
    %vm161 = vcmp.eq.s32.totalorder %v139, %v160
    %v162 = vsel %vm161, %v136, 0.0
    %v163 = vsel %vm145, %v162, 0.0
    %164 = vadd.xlane.f32.xlu0 %v163
    %v165 = vpop.xlane.xlu0 %164
    %v166 = vadd.f32 %v165, 1.0
    %v167 = vrcp.pop %v166
    %v168 = vmul.f32 1.0, %v167
    %v169 = vsub.f32 1.0, %v168
    %v170 = vmax.f32 %v169, 0.0001
    %v171 = vmin.f32 %v170, 1.0
    %v172 = vlog2.pop %v171
    %v173 = vmul.f32 %v172, 0.6931472
    %v174 = vsub.f32 %v157, %v173
    %175 = vset.pattern.permute.xlu0 3
    %176 = vperm.xlu0 %175, %v137
    %v177 = vpop.permute.xlu0 %176
    %vm178 = vcmp.eq.s32.totalorder %v139, %v177
    %v179 = vsel %vm178, %v136, 0.0
    %v180 = vsel %vm145, %v179, 0.0
    %181 = vadd.xlane.f32.xlu0 %v180
    %v182 = vpop.xlane.xlu0 %181
    %v183 = vadd.f32 %v182, 1.0
    %v184 = vrcp.pop %v183
    %v185 = vmul.f32 1.0, %v184
    %v186 = vsub.f32 1.0, %v185
    %v187 = vmax.f32 %v186, 0.0001
    %v188 = vmin.f32 %v187, 1.0
    %v189 = vlog2.pop %v188
    %v190 = vmul.f32 %v189, 0.6931472
    %v191 = vsub.f32 %v174, %v190
    %192 = vset.pattern.permute.xlu0 4
    %193 = vperm.xlu0 %192, %v137
    %v194 = vpop.permute.xlu0 %193
    %vm195 = vcmp.eq.s32.totalorder %v139, %v194
    %v196 = vsel %vm195, %v136, 0.0
    %v197 = vsel %vm145, %v196, 0.0
    %198 = vadd.xlane.f32.xlu0 %v197
    %v199 = vpop.xlane.xlu0 %198
    %v200 = vadd.f32 %v199, 1.0
    %v201 = vrcp.pop %v200
    %v202 = vmul.f32 1.0, %v201
    %v203 = vsub.f32 1.0, %v202
    %v204 = vmax.f32 %v203, 0.0001
    %v205 = vmin.f32 %v204, 1.0
    %v206 = vlog2.pop %v205
    %v207 = vmul.f32 %v206, 0.6931472
    %v208 = vsub.f32 %v191, %v207
    %209 = vset.pattern.permute.xlu0 5
    %210 = vperm.xlu0 %209, %v137
    %v211 = vpop.permute.xlu0 %210
    %vm212 = vcmp.eq.s32.totalorder %v139, %v211
    %v213 = vsel %vm212, %v136, 0.0
    %v214 = vsel %vm145, %v213, 0.0
    %215 = vadd.xlane.f32.xlu0 %v214
    %v216 = vpop.xlane.xlu0 %215
    %v217 = vadd.f32 %v216, 1.0
    %v218 = vrcp.pop %v217
    %v219 = vmul.f32 1.0, %v218
    %v220 = vsub.f32 1.0, %v219
    %v221 = vmax.f32 %v220, 0.0001
    %v222 = vmin.f32 %v221, 1.0
    %v223 = vlog2.pop %v222
    %v224 = vmul.f32 %v223, 0.6931472
    %v225 = vsub.f32 %v208, %v224
    %v226 = vld [vmem:[#allocation2] sm:$0xff]
    %v227 = vadd.f32 %v226, %v225
    %vm228 = vcmask 7168
    %229 = vst.msk [vmem:[#allocation2] sm:$0xff] %vm228, %v227
    // Predicated region
    $region18: #{contrastive_loss_forward.1} parent=1 // pred_check
      %p230 = pneg %p15
    $region19: #{contrastive_loss_forward.1} parent=1 // pred_check_branch
      %232 = sbr.rel (%p230) target = $region21
    $region20: #{contrastive_loss_forward.1} parent=1 // pred_region
      %v233 = vld [vmem:[#allocation2] sm:$0xff]
      %v234 = vsel %vm228, %v233, 0.0
      %235 = vadd.xlane.f32.xlu0 %v234
      %v236 = vpop.xlane.xlu0 %235
      %v237 = vrot.slane %v236, 4
      %v238 = vadd.f32 %v236, %v237
      %v239 = vrot.slane %v238, 2
      %v240 = vadd.f32 %v238, %v239
      %v241 = vrot.slane %v240, 1
      %v242 = vadd.f32 %v240, %v241
      %s243 = vtos %v242
      %v244 = vstv %s243
      %v245 = vmul.f32 %v244, 0.020833334
      %vm246 = vcmask 0
      %247 = vst.msk [vmem:[#allocation3] sm:$0x1] %vm246, %v245
    $region21: #{contrastive_loss_forward.1} parent=1 // pred_fallthru
      _
    // Predicated region
    $region22: #{contrastive_loss_forward.1} parent=1 // pred_check
      _
    $region23: #{contrastive_loss_forward.1} parent=1 // pred_check_branch
      %249 = sbr.rel (0) target = $region25
    $region24: #{contrastive_loss_forward.1} parent=1 // pred_region
      %s251 = ssub.s32 16, 16
      %252 = vsyncadd [#allocation4], %s251
      %s254 = sshll.u32 [#allocation3], 4
      %s255 = int_to_ptr.vmem [resolvable:$true] %s254
      %257 = dma.vmem_to_hbm [thread:$0]  %s255, 16, %s3, [#allocation4]
    $region25: #{contrastive_loss_forward.1} parent=1 // pred_fallthru
      _
    // Predicated region
    $region26: #{contrastive_loss_forward.1} parent=1 // pred_check
      _
    $region27: #{contrastive_loss_forward.1} parent=1 // pred_check_branch
      %259 = sbr.rel (0) target = $region29
    $region28: #{contrastive_loss_forward.1} parent=1 // pred_region
      %260 = dma.done [#allocation4], 16
    $region29: #{contrastive_loss_forward.1} parent=1 // pred_fallthru
      _
    %261 = vsyncpa [#allocation4], 1

</llo_original>
